<compile_context>
chip_gen: v7x
topology: tpu7x:2x2x1
jax: 0.10.0
libtpu: 0.0.40
codegen_flags: <defaults>
</compile_context>

<pallas_src>
import jax
import jax.numpy as jnp
from jax.experimental import pallas as pl
from jax.experimental.pallas import tpu as pltpu


def _round_up(x, m):
    return ((x + m - 1) // m) * m


def _mlp_kernel(x_ref, w1_ref, b1_ref, w2_ref, b2_ref, w3_ref, b3_ref, o_ref):
    """One batch tile: (TB, D) -> lane-dense (1, TB) of sigmoid(logit) * 100."""
    x = x_ref[...]                                            # (TB, D) f32

    # layer1: MXU matmul (bf16 inputs, f32 accumulate); bias + ReLU in f32.
    h1 = jnp.dot(x.astype(jnp.bfloat16), w1_ref[...],
                 preferred_element_type=jnp.float32) + b1_ref[...]
    h1 = jnp.maximum(h1, 0.0)

    # layer2: (TB, 64) @ (64, 32)
    h2 = jnp.dot(h1.astype(jnp.bfloat16), w2_ref[...],
                 preferred_element_type=jnp.float32) + b2_ref[...]
    h2 = jnp.maximum(h2, 0.0)

    # layer3 (32 -> 1): broadcast-multiply + lane reduction on VPU/XLU instead
    # of an N=1 MXU matmul; bias comes from an SMEM scalar.
    h3 = jnp.sum(h2 * w3_ref[...], axis=-1) + b3_ref[0, 0]    # (TB,)

    # Stable sigmoid * 100 (transcendental lands on the EUP).
    out = 100.0 * jax.nn.sigmoid(h3)

    # Lane-dense store: one (1, TB) row per grid step.
    o_ref[...] = out.reshape(1, -1).astype(o_ref.dtype)


def food_prediction_forward(x, params, *, block_rows=1024):
    """Forward pass of FoodPredictionModel via a single pallas_call."""
    w1, b1, w2, b2, w3, b3 = params
    batch, input_dim = x.shape

    # bf16 weights halve HBM weight traffic; accumulation stays f32.
    w1b = w1.astype(jnp.bfloat16)
    w2b = w2.astype(jnp.bfloat16)
    w3_row = w3.reshape(1, -1).astype(jnp.float32)            # (1, 32), VPU path
    b3_s = b3.reshape(1, 1).astype(jnp.float32)               # SMEM scalar
    b1 = b1.reshape(1, -1).astype(jnp.float32)
    b2 = b2.reshape(1, -1).astype(jnp.float32)
    x = x.astype(jnp.float32)

    # Batch tile: a single full tile when it fits, otherwise a multiple of 128
    # so the (1, TB) output blocks stay lane-aligned and unmasked.
    full_rows = _round_up(batch, 8)
    tb = full_rows if full_rows <= block_rows else _round_up(block_rows, 128)
    padded = _round_up(batch, tb)
    if padded != batch:
        x = jnp.pad(x, ((0, padded - batch), (0, 0)))
    num_tiles = padded // tb

    flops = int(2 * padded * (input_dim * 64 + 64 * 32 + 32))
    bytes_accessed = int(padded * input_dim * 4 + padded * 4
                         + w1b.size * 2 + w2b.size * 2
                         + (b1.size + b2.size + w3_row.size + 1) * 4)

    out_row = pl.pallas_call(
        _mlp_kernel,
        out_shape=jax.ShapeDtypeStruct((1, padded), jnp.float32),
        grid=(num_tiles,),
        in_specs=[
            pl.BlockSpec((tb, input_dim), lambda i: (i, 0)),  # x: streamed
            pl.BlockSpec(w1b.shape, lambda i: (0, 0)),        # weights resident
            pl.BlockSpec(b1.shape, lambda i: (0, 0)),
            pl.BlockSpec(w2b.shape, lambda i: (0, 0)),
            pl.BlockSpec(b2.shape, lambda i: (0, 0)),
            pl.BlockSpec(w3_row.shape, lambda i: (0, 0)),
            pl.BlockSpec((1, 1), lambda i: (0, 0),
                         memory_space=pltpu.MemorySpace.SMEM),  # b3 scalar
        ],
        out_specs=pl.BlockSpec((1, tb), lambda i: (0, i)),    # lane-dense rows
        compiler_params=pltpu.CompilerParams(
            dimension_semantics=("parallel",)),
        cost_estimate=pl.CostEstimate(flops=flops,
                                      transcendentals=padded,
                                      bytes_accessed=bytes_accessed),
    )(x, w1b, b1, w2b, b2, w3_row, b3_s)

    return out_row.reshape(-1)[:batch].reshape(batch, 1)


def init_params(key, input_dim):
    """Deterministic init mimicking nn.Linear default (uniform +/- 1/sqrt(fan_in))."""
    def linear(key, fan_in, fan_out):
        kw, kb = jax.random.split(key)
        bound = 1.0 / jnp.sqrt(fan_in)
        w = jax.random.uniform(kw, (fan_in, fan_out), jnp.float32, -bound, bound)
        b = jax.random.uniform(kb, (1, fan_out), jnp.float32, -bound, bound)
        return w, b

    k1, k2, k3 = jax.random.split(key, 3)
    w1, b1 = linear(k1, input_dim, 64)
    w2, b2 = linear(k2, 64, 32)
    w3, b3 = linear(k3, 32, 1)
    return w1, b1, w2, b2, w3, b3


def _reference_forward(x, params):
    """Pure-JAX reference mirroring the kernel numerics (bf16 MXU inputs, f32 acc)."""
    w1, b1, w2, b2, w3, b3 = params
    h = jnp.dot(x.astype(jnp.bfloat16), w1.astype(jnp.bfloat16),
                preferred_element_type=jnp.float32) + b1
    h = jnp.maximum(h, 0.0)
    h = jnp.dot(h.astype(jnp.bfloat16), w2.astype(jnp.bfloat16),
                preferred_element_type=jnp.float32) + b2
    h = jnp.maximum(h, 0.0)
    h3 = jnp.sum(h * w3.reshape(1, -1), axis=-1, keepdims=True) + b3.reshape(1, 1)
    return 100.0 * jax.nn.sigmoid(h3)


if __name__ == "__main__":
    key = jax.random.PRNGKey(0)
    k_x, k_p = jax.random.split(key)

    batch, input_dim = 8, 16
    x = jax.random.normal(k_x, (batch, input_dim), dtype=jnp.float32)
    params = init_params(k_p, input_dim)

    out = food_prediction_forward(x, params)
    out = jax.block_until_ready(out)

    ref = _reference_forward(x, params)
    assert out.shape == (batch, 1)
    assert jnp.allclose(out, ref, atol=5e-3, rtol=1e-3), (
        f"max abs err {jnp.max(jnp.abs(out - ref))}")

    print("KERNEL_OK")
</pallas_src>

<mosaic_0001>
module attributes {stable_mosaic.version = 11 : i64} {
  func.func @_mlp_kernel(%arg0: i32, %arg1: memref<8x16xf32, #tpu.memory_space<vmem>>, %arg2: memref<16x64xbf16, #tpu.memory_space<vmem>>, %arg3: memref<1x64xf32, #tpu.memory_space<vmem>>, %arg4: memref<64x32xbf16, #tpu.memory_space<vmem>>, %arg5: memref<1x32xf32, #tpu.memory_space<vmem>>, %arg6: memref<1x32xf32, #tpu.memory_space<vmem>>, %arg7: memref<1x1xf32, #tpu.memory_space<smem>>, %arg8: memref<1x8xf32, #tpu.memory_space<vmem>>) attributes {dimension_semantics = [#tpu.dimension_semantics<parallel>], iteration_bounds = array<i64: 1>, scalar_prefetch = 0 : i64, scratch_operands = 0 : i64, tpu.core_type = #tpu.core_type<tc>, window_params = [{transform_indices = @transform_0, window_bounds = array<i64: 8, 16>}, {pipeline_mode = #tpu.pipeline_mode<synchronous>, transform_indices = @transform_1, window_bounds = array<i64: 16, 64>}, {pipeline_mode = #tpu.pipeline_mode<synchronous>, transform_indices = @transform_2, window_bounds = array<i64: 1, 64>}, {pipeline_mode = #tpu.pipeline_mode<synchronous>, transform_indices = @transform_3, window_bounds = array<i64: 64, 32>}, {pipeline_mode = #tpu.pipeline_mode<synchronous>, transform_indices = @transform_4, window_bounds = array<i64: 1, 32>}, {pipeline_mode = #tpu.pipeline_mode<synchronous>, transform_indices = @transform_5, window_bounds = array<i64: 1, 32>}, {transform_indices = @transform_6, window_bounds = array<i64: 1, 1>}, {transform_indices = @transform_7, window_bounds = array<i64: 1, 8>}]} {
    %c0 = arith.constant 0 : index
    %c0_0 = arith.constant 0 : index
    %0 = vector.load %arg1[%c0, %c0_0] : memref<8x16xf32, #tpu.memory_space<vmem>>, vector<8x16xf32>
    %1 = arith.truncf %0 : vector<8x16xf32> to vector<8x16xbf16>
    %c0_1 = arith.constant 0 : index
    %c0_2 = arith.constant 0 : index
    %2 = vector.load %arg2[%c0_1, %c0_2] : memref<16x64xbf16, #tpu.memory_space<vmem>>, vector<16x64xbf16>
    %cst = arith.constant dense<0.000000e+00> : vector<8x64xf32>
    %3 = tpu.matmul %1, %2, %cst {dimension_numbers = #tpu.dot_dimension_numbers<[1], [0], [0], [1], [0, 0, 1, 1], [], []>} : vector<8x16xbf16>, vector<16x64xbf16>, vector<8x64xf32> -> vector<8x64xf32>
    %c0_3 = arith.constant 0 : index
    %c0_4 = arith.constant 0 : index
    %4 = vector.load %arg3[%c0_3, %c0_4] : memref<1x64xf32, #tpu.memory_space<vmem>>, vector<1x64xf32>
    %5 = vector.broadcast %4 : vector<1x64xf32> to vector<8x64xf32>
    %6 = arith.addf %3, %5 : vector<8x64xf32>
    %cst_5 = arith.constant 0.000000e+00 : f32
    %7 = vector.broadcast %cst_5 : f32 to vector<8x64xf32>
    %8 = arith.maximumf %6, %7 : vector<8x64xf32>
    %9 = arith.truncf %8 : vector<8x64xf32> to vector<8x64xbf16>
    %c0_6 = arith.constant 0 : index
    %c0_7 = arith.constant 0 : index
    %10 = vector.load %arg4[%c0_6, %c0_7] : memref<64x32xbf16, #tpu.memory_space<vmem>>, vector<64x32xbf16>
    %cst_8 = arith.constant dense<0.000000e+00> : vector<8x32xf32>
    %11 = tpu.matmul %9, %10, %cst_8 {dimension_numbers = #tpu.dot_dimension_numbers<[1], [0], [0], [1], [0, 0, 1, 1], [], []>} : vector<8x64xbf16>, vector<64x32xbf16>, vector<8x32xf32> -> vector<8x32xf32>
    %c0_9 = arith.constant 0 : index
    %c0_10 = arith.constant 0 : index
    %12 = vector.load %arg5[%c0_9, %c0_10] : memref<1x32xf32, #tpu.memory_space<vmem>>, vector<1x32xf32>
    %13 = vector.broadcast %12 : vector<1x32xf32> to vector<8x32xf32>
    %14 = arith.addf %11, %13 : vector<8x32xf32>
    %cst_11 = arith.constant 0.000000e+00 : f32
    %15 = vector.broadcast %cst_11 : f32 to vector<8x32xf32>
    %16 = arith.maximumf %14, %15 : vector<8x32xf32>
    %c0_12 = arith.constant 0 : index
    %c0_13 = arith.constant 0 : index
    %17 = vector.load %arg6[%c0_12, %c0_13] : memref<1x32xf32, #tpu.memory_space<vmem>>, vector<1x32xf32>
    %18 = vector.broadcast %17 : vector<1x32xf32> to vector<8x32xf32>
    %19 = arith.mulf %16, %18 : vector<8x32xf32>
    %cst_14 = arith.constant dense<0.000000e+00> : vector<8xf32>
    %20 = vector.multi_reduction <add>, %19, %cst_14 [1] : vector<8x32xf32> to vector<8xf32>
    %c0_15 = arith.constant 0 : index
    %c0_16 = arith.constant 0 : index
    %21 = memref.load %arg7[%c0_15, %c0_16] : memref<1x1xf32, #tpu.memory_space<smem>>
    %22 = vector.broadcast %21 : f32 to vector<8xf32>
    %23 = arith.addf %20, %22 : vector<8xf32>
    %24 = arith.negf %23 : vector<8xf32>
    %25 = math.exp %24 : vector<8xf32>
    %cst_17 = arith.constant 1.000000e+00 : f32
    %26 = vector.broadcast %cst_17 : f32 to vector<8xf32>
    %27 = arith.addf %26, %25 : vector<8xf32>
    %28 = arith.divf %26, %27 : vector<8xf32>
    %cst_18 = arith.constant 1.000000e+02 : f32
    %29 = vector.broadcast %cst_18 : f32 to vector<8xf32>
    %30 = arith.mulf %29, %28 : vector<8xf32>
    %31 = vector.shape_cast %30 : vector<8xf32> to vector<1x8xf32>
    %c0_19 = arith.constant 0 : index
    %c0_20 = arith.constant 0 : index
    %32 = vector.load %arg8[%c0_19, %c0_20] : memref<1x8xf32, #tpu.memory_space<vmem>>, vector<1x8xf32>
    tpu.vector_store %arg8[%c0_19, %c0_20], %31 {strides = array<i32>} : memref<1x8xf32, #tpu.memory_space<vmem>>, vector<1x8xf32>,
    return
  }
  func.func @transform_0(%arg0: i32) -> (i32, i32) {
    %c0_i32 = arith.constant 0 : i32
    %c0_i32_0 = arith.constant 0 : i32
    return %arg0, %c0_i32 : i32, i32
  }
  func.func @transform_1(%arg0: i32) -> (i32, i32) {
    %c0_i32 = arith.constant 0 : i32
    %c0_i32_0 = arith.constant 0 : i32
    %c0_i32_1 = arith.constant 0 : i32
    return %c0_i32, %c0_i32_0 : i32, i32
  }
  func.func @transform_2(%arg0: i32) -> (i32, i32) {
    %c0_i32 = arith.constant 0 : i32
    %c0_i32_0 = arith.constant 0 : i32
    %c0_i32_1 = arith.constant 0 : i32
    return %c0_i32, %c0_i32_0 : i32, i32
  }
  func.func @transform_3(%arg0: i32) -> (i32, i32) {
    %c0_i32 = arith.constant 0 : i32
    %c0_i32_0 = arith.constant 0 : i32
    %c0_i32_1 = arith.constant 0 : i32
    return %c0_i32, %c0_i32_0 : i32, i32
  }
  func.func @transform_4(%arg0: i32) -> (i32, i32) {
    %c0_i32 = arith.constant 0 : i32
    %c0_i32_0 = arith.constant 0 : i32
    %c0_i32_1 = arith.constant 0 : i32
    return %c0_i32, %c0_i32_0 : i32, i32
  }
  func.func @transform_5(%arg0: i32) -> (i32, i32) {
    %c0_i32 = arith.constant 0 : i32
    %c0_i32_0 = arith.constant 0 : i32
    %c0_i32_1 = arith.constant 0 : i32
    return %c0_i32, %c0_i32_0 : i32, i32
  }
  func.func @transform_6(%arg0: i32) -> (i32, i32) {
    %c0_i32 = arith.constant 0 : i32
    %c0_i32_0 = arith.constant 0 : i32
    %c0_i32_1 = arith.constant 0 : i32
    return %c0_i32, %c0_i32_0 : i32, i32
  }
  func.func @transform_7(%arg0: i32) -> (i32, i32) {
    %c0_i32 = arith.constant 0 : i32
    %c0_i32_0 = arith.constant 0 : i32
    return %c0_i32, %arg0 : i32, i32
  }
}

</mosaic_0001>

<llo_original>
// kernel: tpu_custom_call.1
$region0: #{tpu_custom_call.1}
  #allocation0 [shape = 'u32[]', space=smem, size = 0x4, offset = 0x4, fixed_abs, tag = 'smem constant byte address 0x4 - core index']
  #allocation1 [shape = 'u32[144,128]{1,0:T(1,128)}', space=vmem, size = 0x12000, scoped, tag = 'internal scratch']
  #allocation2 [shape = 'f32[1,1]{1,0:T(1,128)S(6)}', space=smem, size = 0x200, scoped, tag = 'scoped memory for tpu_custom_call.1']
  %s0 = inlined_call_operand.vmem [shape: f32[8,16], index: 0, kind: input, shape index: {}]
  %s1 = inlined_call_operand.vmem [shape: bf16[16,64], index: 1, kind: input, shape index: {}]
  %s2 = inlined_call_operand.vmem [shape: f32[1,64], index: 2, kind: input, shape index: {}]
  %s3 = inlined_call_operand.vmem [shape: bf16[64,32], index: 3, kind: input, shape index: {}]
  %s4 = inlined_call_operand.vmem [shape: f32[1,32], index: 4, kind: input, shape index: {}]
  %s5 = inlined_call_operand.vmem [shape: f32[1,32], index: 5, kind: input, shape index: {}]
  %s6 = inlined_call_operand.<no memory space> [shape: f32[1,1], index: 6, kind: input, shape index: {}]
  %s7 = inlined_call_operand.hbm [shape: f32[1,8], index: 7, kind: output, shape index: {}]
  %s8 = sld [smem:[#allocation0]]
  $region38: #{tpu_custom_call.1} parent=0
    _
  %s10 = ssub.s32 1, %s8
  %s11 = scalar_select 0, %s10, %s8
  %12 = sst [smem:[#allocation2]] %s6
  $region1: #{tpu_custom_call.1} parent=0
    #allocation3 [shape = 'u8[512]{0}', space=vmem, size = 0x400, scoped, tag = 'output window, operand 0, single buffered']
    #allocation4 [shape = 's32[1]{0}', space=sflag, size = 0x4, scoped, tag = 'scoped memory for tpu_custom_call.1']
    %13 = vsyncpa [#allocation4], 0
    // Predicated region
    $region2: #{tpu_custom_call.1} parent=1 // pred_check
      _
    $region3: #{tpu_custom_call.1} parent=1 // pred_check_branch
      %15 = sbr.rel (0) target = $region5
    $region4: #{tpu_custom_call.1} parent=1 // pred_region
      _
    $region5: #{tpu_custom_call.1} parent=1 // pred_fallthru
      _
    // Predicated region
    $region6: #{tpu_custom_call.1} parent=1 // pred_check
      _
    $region7: #{tpu_custom_call.1} parent=1 // pred_check_branch
      %17 = sbr.rel (0) target = $region9
    $region8: #{tpu_custom_call.1} parent=1 // pred_region
      _
    $region9: #{tpu_custom_call.1} parent=1 // pred_fallthru
      _
    // Predicated region
    $region10: #{tpu_custom_call.1} parent=1 // pred_check
      _
    $region11: #{tpu_custom_call.1} parent=1 // pred_check_branch
      %19 = sbr.rel (0) target = $region13
    $region12: #{tpu_custom_call.1} parent=1 // pred_region
      _
    $region13: #{tpu_custom_call.1} parent=1 // pred_fallthru
      _
    // Predicated region
    $region14: #{tpu_custom_call.1} parent=1 // pred_check
      _
    $region15: #{tpu_custom_call.1} parent=1 // pred_check_branch
      %21 = sbr.rel (0) target = $region17
    $region16: #{tpu_custom_call.1} parent=1 // pred_region
      _
    $region17: #{tpu_custom_call.1} parent=1 // pred_fallthru
      _
    // Predicated region
    $region18: #{tpu_custom_call.1} parent=1 // pred_check
      _
    $region19: #{tpu_custom_call.1} parent=1 // pred_check_branch
      %23 = sbr.rel (0) target = $region21
    $region20: #{tpu_custom_call.1} parent=1 // pred_region
      _
    $region21: #{tpu_custom_call.1} parent=1 // pred_fallthru
      _
    // Predicated region
    $region22: #{tpu_custom_call.1} parent=1 // pred_check
      _
    $region23: #{tpu_custom_call.1} parent=1 // pred_check_branch
      %25 = sbr.rel (0) target = $region25
    $region24: #{tpu_custom_call.1} parent=1 // pred_region
      _
    $region25: #{tpu_custom_call.1} parent=1 // pred_fallthru
      _
    // Predicated region
    $region26: #{tpu_custom_call.1} parent=1 // pred_check
      _
    $region27: #{tpu_custom_call.1} parent=1 // pred_check_branch
      %27 = sbr.rel (0) target = $region29
    $region28: #{tpu_custom_call.1} parent=1 // pred_region
      _
    $region29: #{tpu_custom_call.1} parent=1 // pred_fallthru
      _
    %v29 = vld [vmem:[%s0] sm:$0xff]
    %v30 = vpack.c.bf16 %v29, %v29
    %v31 = vld [vmem:[%s1] sm:$0xf]
    %v32 = vld [vmem:[%s1 + $0x4] sm:$0xf]
    %v33 = vld [vmem:[%s2] sm:$0x1]
    %v35 = vlaneseq
    %v36 = vshrl.u32 %v35, 7
    %v37 = vsub.s32 0, %v36
    %v38 = vrot.slane %v33, %v37
    %v42 = vunpack.c.l.b16 %v31
    %v43 = vunpack.c.l.b16 %v32
    %v44 = vpack.c.b16 %v43, %v42
    %vm46 = vcmask 130048
    %v48 = vsel %vm46, %v30, 0
    %50 = vmatprep.subr.bf16.mxu0 0
    %51 = vmatpush1.bf16.msra.mxu0 %v44
    %52 = vmatprep.subr.bf16.mxu0 0
    %53 = vmatpush1.bf16.msra.mxu0 0
    %54 = vmatprep.subr.bf16.mxu0 0
    %55 = vmatpush1.bf16.msra.mxu0 0
    %56 = vmatprep.subr.bf16.mxu0 0
    %57 = vmatpush1.bf16.msra.mxu0 0
    %58 = vmatprep.subr.bf16.mxu0 0
    %59 = vmatpush1.bf16.msra.mxu0 0
    %60 = vmatprep.subr.bf16.mxu0 0
    %61 = vmatpush1.bf16.msra.mxu0 0
    %62 = vmatprep.subr.bf16.mxu0 0
    %63 = vmatpush1.bf16.msra.mxu0 0
    %64 = vmatprep.subr.bf16.mxu0 0
    %65 = vmatpush1.bf16.msra.mxu0 0
    %66 = vmatprep.subr.bf16.mxu0 0
    %67 = vmatpush1.bf16.msra.mxu0 0
    %68 = vmatprep.subr.bf16.mxu0 0
    %69 = vmatpush1.bf16.msra.mxu0 0
    %70 = vmatprep.subr.bf16.mxu0 0
    %71 = vmatpush1.bf16.msra.mxu0 0
    %72 = vmatprep.subr.bf16.mxu0 0
    %73 = vmatpush1.bf16.msra.mxu0 0
    %74 = vmatprep.subr.bf16.mxu0 0
    %75 = vmatpush1.bf16.msra.mxu0 0
    %76 = vmatprep.subr.bf16.mxu0 0
    %77 = vmatpush1.bf16.msra.mxu0 0
    %78 = vmatprep.subr.bf16.mxu0 0
    %79 = vmatpush1.bf16.msra.mxu0 0
    %80 = vmatprep.subr.bf16.mxu0 0
    %81 = vmatpush1.bf16.msra.mxu0 0
    %82 = vmatprep.mubr.bf16.mxu0 0
    %83 = vmatmul.mubr.bf16.gmra.mrb[0].mxu0 %v48
    %v84 = vpop.f32.mrb[0].mxu0
    %v85 = vadd.f32 %v38, %v84
    %v86 = vpop.f32.mrb[0].mxu0
    %v87 = vpop.f32.mrb[0].mxu0
    %v88 = vpop.f32.mrb[0].mxu0
    %89 = vdwg.mxu0
    %v90 = vmax.f32 %v85, 0.0
    %v91 = vpack.c.bf16 %v90, %v90
    %v92 = vld [vmem:[%s3] sm:$0xf]
    %v93 = vld [vmem:[%s3 + $0x4] sm:$0xf]
    %v94 = vld [vmem:[%s3 + $0x8] sm:$0xf]
    %v95 = vld [vmem:[%s3 + $0xc] sm:$0xf]
    %v96 = vld [vmem:[%s3 + $0x10] sm:$0xf]
    %v97 = vld [vmem:[%s3 + $0x14] sm:$0xf]
    %v98 = vld [vmem:[%s3 + $0x18] sm:$0xf]
    %v99 = vld [vmem:[%s3 + $0x1c] sm:$0xf]
    %v100 = vld [vmem:[%s4] sm:$0x1]
    %v102 = vlaneseq
    %v103 = vshrl.u32 %v102, 7
    %v104 = vsub.s32 0, %v103
    %v105 = vrot.slane %v100, %v104
    %v115 = vunpack.c.l.b16 %v92
    %v116 = vunpack.c.l.b16 %v93
    %v117 = vunpack.c.l.b16 %v94
    %v118 = vunpack.c.l.b16 %v95
    %v119 = vunpack.c.l.b16 %v96
    %v120 = vunpack.c.l.b16 %v97
    %v121 = vunpack.c.l.b16 %v98
    %v122 = vunpack.c.l.b16 %v99
    %v123 = vpack.c.b16 %v116, %v115
    %v124 = vpack.c.b16 %v118, %v117
    %v125 = vpack.c.b16 %v120, %v119
    %v126 = vpack.c.b16 %v122, %v121
    %vm131 = vcmask 523264
    %v133 = vsel %vm131, %v91, 0
    %135 = vmatprep.subr.bf16.mxu0 0
    %136 = vmatpush1.bf16.msra.mxu0 %v123
    %137 = vmatprep.subr.bf16.mxu0 0
    %138 = vmatpush1.bf16.msra.mxu0 %v124
    %139 = vmatprep.subr.bf16.mxu0 0
    %140 = vmatpush1.bf16.msra.mxu0 %v125
    %141 = vmatprep.subr.bf16.mxu0 0
    %142 = vmatpush1.bf16.msra.mxu0 %v126
    %143 = vmatprep.subr.bf16.mxu0 0
    %144 = vmatpush1.bf16.msra.mxu0 0
    %145 = vmatprep.subr.bf16.mxu0 0
    %146 = vmatpush1.bf16.msra.mxu0 0
    %147 = vmatprep.subr.bf16.mxu0 0
    %148 = vmatpush1.bf16.msra.mxu0 0
    %149 = vmatprep.subr.bf16.mxu0 0
    %150 = vmatpush1.bf16.msra.mxu0 0
    %151 = vmatprep.subr.bf16.mxu0 0
    %152 = vmatpush1.bf16.msra.mxu0 0
    %153 = vmatprep.subr.bf16.mxu0 0
    %154 = vmatpush1.bf16.msra.mxu0 0
    %155 = vmatprep.subr.bf16.mxu0 0
    %156 = vmatpush1.bf16.msra.mxu0 0
    %157 = vmatprep.subr.bf16.mxu0 0
    %158 = vmatpush1.bf16.msra.mxu0 0
    %159 = vmatprep.subr.bf16.mxu0 0
    %160 = vmatpush1.bf16.msra.mxu0 0
    %161 = vmatprep.subr.bf16.mxu0 0
    %162 = vmatpush1.bf16.msra.mxu0 0
    %163 = vmatprep.subr.bf16.mxu0 0
    %164 = vmatpush1.bf16.msra.mxu0 0
    %165 = vmatprep.subr.bf16.mxu0 0
    %166 = vmatpush1.bf16.msra.mxu0 0
    %167 = vmatprep.mubr.bf16.mxu0 0
    %168 = vmatmul.mubr.bf16.gmra.mrb[0].mxu0 %v133
    %v169 = vpop.f32.mrb[0].mxu0
    %v170 = vadd.f32 %v105, %v169
    %v171 = vpop.f32.mrb[0].mxu0
    %v172 = vpop.f32.mrb[0].mxu0
    %v173 = vpop.f32.mrb[0].mxu0
    %174 = vdwg.mxu0
    %v175 = vmax.f32 %v170, 0.0
    %v176 = vld [vmem:[%s5] sm:$0x1]
    %v178 = vlaneseq
    %v179 = vshrl.u32 %v178, 7
    %v180 = vsub.s32 0, %v179
    %v181 = vrot.slane %v176, %v180
    %v183 = vmul.f32 %v175, %v181
    %vm184 = vcmask 261120
    %v185 = vsel %vm184, %v183, 0.0
    %186 = vadd.xlane.f32.xlu0 %v185
    %v187 = vpop.xlane.xlu0 %186
    %s188 = sld [smem:[#allocation2]]
    %v189 = vstv %s188
    %v190 = vadd.f32 %v187, %v189
    %v191 = vxor.u32 %v190, 2147483648
    %v192 = vmul.f32 %v191, 1.442695
    %v193 = vpow.pop %v192
    %v194 = vadd.f32 %v193, 1.0
    %v195 = vrcp.pop %v194
    %v196 = vmul.f32 1.0, %v195
    %v197 = vmul.f32 %v196, 100.0
    %v199 = vlaneseq
    %v200 = vand.u32 %v199, 127
    %v201 = vlaneseq
    %v202 = vshrl.u32 %v201, 7
    %v203 = vsub.s32 %v200, %v202
    %v204 = vrot.slane %v197, %v203
    %vm206 = vcmask 57344
    %207 = vst.msk [vmem:[#allocation3] sm:$0x1] %vm206, %v204
    // Predicated region
    $region30: #{tpu_custom_call.1} parent=1 // pred_check
      _
    $region31: #{tpu_custom_call.1} parent=1 // pred_check_branch
      %209 = sbr.rel (0) target = $region33
    $region32: #{tpu_custom_call.1} parent=1 // pred_region
      %s211 = ssub.s32 16, 16
      %212 = vsyncadd [#allocation4], %s211
      %s214 = sshll.u32 [#allocation3], 4
      %s215 = int_to_ptr.vmem [resolvable:$true] %s214
      %217 = dma.vmem_to_hbm [thread:$0]  %s215, 16, %s7, [#allocation4]
    $region33: #{tpu_custom_call.1} parent=1 // pred_fallthru
      _
    // Predicated region
    $region34: #{tpu_custom_call.1} parent=1 // pred_check
      _
    $region35: #{tpu_custom_call.1} parent=1 // pred_check_branch
      %219 = sbr.rel (0) target = $region37
    $region36: #{tpu_custom_call.1} parent=1 // pred_region
      %220 = dma.done [#allocation4], 16
    $region37: #{tpu_custom_call.1} parent=1 // pred_fallthru
      _
    %221 = vsyncpa [#allocation4], 1

</llo_original>
